<compile_context>
chip_gen: v6e
topology: v6e:2x2x1
jax: 0.10.0
libtpu: 0.0.40
codegen_flags: <defaults>
</compile_context>

<pallas_src>
import jax
import jax.numpy as jnp
from jax import lax
from jax.experimental import pallas as pl
from jax.experimental.pallas import tpu as pltpu


_VMEM_LIMIT_BYTES = 48 << 20        # fits v7x (64 MiB physical) and v5e/v6e (128 MiB)
_ACTIONS_VMEM_BUDGET = 40 << 20     # budget for the double-buffered actions tiles


def _round_up(x: int, m: int) -> int:
    return ((x + m - 1) // m) * m


def _choose_tile_n(n: int, e: int, itemsize: int = 4) -> int:
    """Largest lane-aligned tile that keeps 2-deep pipelining inside VMEM."""
    per_row = 2 * e * itemsize                       # double-buffered actions rows
    cap = max(128, min(2048, (_ACTIONS_VMEM_BUDGET // per_row) // 128 * 128))
    return min(cap, _round_up(n, 128))


def fc_kernel(state_ref, w_ref, b_ref, h_ref):
    # h = state @ W^T + b.  Contract input-feature dims of both operands so the
    # MXU consumes W in its native PyTorch (out_features, in_features) layout.
    h = lax.dot_general(
        state_ref[...], w_ref[...],
        dimension_numbers=(((1,), (1,)), ((), ())),
        preferred_element_type=jnp.float32)
    h_ref[...] = (h + b_ref[...]).astype(h_ref.dtype)


def score_kernel(h_ref, actions_ref, out_ref):
    # scores = actions_tile @ h^T, emitted lane-dense as (1, TILE_N).
    out_ref[...] = lax.dot_general(
        h_ref[...], actions_ref[...],
        dimension_numbers=(((1,), (1,)), ((), ())),
        preferred_element_type=jnp.float32).astype(out_ref.dtype)


def rec_forward(state, weight, bias, actions, *, tile_n=None):
    """Pallas implementation of RecModel.forward.

    state:   (E,)   float32
    weight:  (E, E) float32  (nn.Linear weight, out x in)
    bias:    (E,)   float32
    actions: (N, E) float32
    returns: (N,)   float32  == torch.matmul(actions, fc(state).T).squeeze()
    """
    E = state.shape[-1]
    N = actions.shape[0]
    state2d = state.reshape(1, E).astype(jnp.float32)
    bias2d = bias.reshape(1, E).astype(jnp.float32)
    weight = weight.astype(jnp.float32)
    actions = actions.astype(jnp.float32)

    # --- h = fc(state), computed exactly once (not per actions tile) ---------
    h = pl.pallas_call(
        fc_kernel,
        out_shape=jax.ShapeDtypeStruct((1, E), jnp.float32),
        in_specs=[
            pl.BlockSpec((1, E), lambda: (0, 0)),
            pl.BlockSpec((E, E), lambda: (0, 0)),
            pl.BlockSpec((1, E), lambda: (0, 0)),
        ],
        out_specs=pl.BlockSpec((1, E), lambda: (0, 0)),
        compiler_params=pltpu.CompilerParams(
            vmem_limit_bytes=_VMEM_LIMIT_BYTES),
        cost_estimate=pl.CostEstimate(
            flops=2 * E * E,
            transcendentals=0,
            bytes_accessed=4 * (E * E + 3 * E)),
    )(state2d, weight, bias2d)

    # --- scores = actions @ h^T, tiled & pipelined over N --------------------
    if tile_n is None:
        tile_n = _choose_tile_n(N, E)
    assert tile_n % 128 == 0, "tile_n must be lane-aligned (multiple of 128)"
    n_pad = _round_up(N, tile_n)
    if n_pad != N:
        # zero-pad the tail tile; padded rows score 0 and are sliced off below
        actions = jnp.pad(actions, ((0, n_pad - N), (0, 0)))

    scores = pl.pallas_call(
        score_kernel,
        out_shape=jax.ShapeDtypeStruct((1, n_pad), jnp.float32),
        grid=(n_pad // tile_n,),
        in_specs=[
            pl.BlockSpec((1, E), lambda i: (0, 0)),        # h resident
            pl.BlockSpec((tile_n, E), lambda i: (i, 0)),   # streamed over N
        ],
        out_specs=pl.BlockSpec((1, tile_n), lambda i: (0, i)),  # lane-dense
        compiler_params=pltpu.CompilerParams(
            dimension_semantics=("parallel",),
            vmem_limit_bytes=_VMEM_LIMIT_BYTES),
        cost_estimate=pl.CostEstimate(
            flops=2 * n_pad * E,
            transcendentals=0,
            bytes_accessed=4 * (n_pad * E + E + n_pad)),
    )(h, actions)

    # torch .squeeze() drops the size-1 dim -> (N,).
    # (Edge case: torch returns a 0-d scalar when N == 1; we keep shape (1,).)
    return scores[0, :N]


def rec_pi(state, weight, bias, actions):
    # softmax over dim=0 of the forward scores (plain-JAX glue on kernel output)
    logits = rec_forward(state, weight, bias, actions)
    return jax.nn.softmax(logits, axis=0)


# TODO(synk): GRUCell-based `proceed` and the sampling-based `run_seq` /
# `run_train` loops are host-side, data-dependent control flow (Categorical
# sampling, optimizer steps) and are not part of the forward hot path here.


if __name__ == "__main__":
    key = jax.random.PRNGKey(0)

    # --- toy case matching the module defaults: identity fc ------------------
    N, E = 8, 32  # number of publication embeddings, embedding size
    A = jax.random.normal(key, (N, E), dtype=jnp.float32)
    fc_weight = jnp.eye(E, dtype=jnp.float32)
    fc_bias = jnp.zeros((E,), dtype=jnp.float32)

    state = A[0]
    actions = A

    out = jax.block_until_ready(rec_forward(state, fc_weight, fc_bias, actions))
    ref = actions @ (state @ fc_weight.T + fc_bias)
    assert out.shape == (N,)
    assert jnp.allclose(out, ref, atol=1e-5, rtol=1e-5)

    probs = jax.block_until_ready(rec_pi(state, fc_weight, fc_bias, actions))
    ref_probs = jax.nn.softmax(ref, axis=0)
    assert probs.shape == (N,)
    assert jnp.allclose(probs, ref_probs, atol=1e-5, rtol=1e-5)

    # --- multi-tile case (exercises the N grid, padding + parallel axis) -----
    k1, k2, k3, k4 = jax.random.split(key, 4)
    N2, E2 = 300, 256
    A2 = jax.random.normal(k1, (N2, E2), dtype=jnp.float32)
    W2 = jax.random.normal(k2, (E2, E2), dtype=jnp.float32) * 0.05
    b2 = jax.random.normal(k3, (E2,), dtype=jnp.float32) * 0.05
    s2 = jax.random.normal(k4, (E2,), dtype=jnp.float32)

    out2 = jax.block_until_ready(
        rec_forward(s2, W2, b2, A2, tile_n=128))   # 3 grid steps, padded tail
    ref2 = A2 @ (s2 @ W2.T + b2)
    assert out2.shape == (N2,)
    assert jnp.allclose(out2, ref2, atol=1e-3, rtol=1e-3)

    print("KERNEL_OK")
</pallas_src>

<mosaic_0001>
module attributes {stable_mosaic.version = 11 : i64} {
  func.func @fc_kernel(%arg0: memref<1x32xf32, #tpu.memory_space<vmem>>, %arg1: memref<32x32xf32, #tpu.memory_space<vmem>>, %arg2: memref<1x32xf32, #tpu.memory_space<vmem>>, %arg3: memref<1x32xf32, #tpu.memory_space<vmem>>) attributes {dimension_semantics = [], scalar_prefetch = 0 : i64, scratch_operands = 0 : i64, tpu.core_type = #tpu.core_type<tc>} {
    %c0 = arith.constant 0 : index
    %c0_0 = arith.constant 0 : index
    %0 = vector.load %arg0[%c0, %c0_0] : memref<1x32xf32, #tpu.memory_space<vmem>>, vector<1x32xf32>
    %c0_1 = arith.constant 0 : index
    %c0_2 = arith.constant 0 : index
    %1 = vector.load %arg1[%c0_1, %c0_2] : memref<32x32xf32, #tpu.memory_space<vmem>>, vector<32x32xf32>
    %cst = arith.constant dense<0.000000e+00> : vector<1x32xf32>
    %2 = tpu.matmul %0, %1, %cst {dimension_numbers = #tpu.dot_dimension_numbers<[1], [1], [0], [0], [0, 0, 1, 0], [], []>} : vector<1x32xf32>, vector<32x32xf32>, vector<1x32xf32> -> vector<1x32xf32>
    %c0_3 = arith.constant 0 : index
    %c0_4 = arith.constant 0 : index
    %3 = vector.load %arg2[%c0_3, %c0_4] : memref<1x32xf32, #tpu.memory_space<vmem>>, vector<1x32xf32>
    %4 = arith.addf %2, %3 : vector<1x32xf32>
    %c0_5 = arith.constant 0 : index
    %c0_6 = arith.constant 0 : index
    %5 = vector.load %arg3[%c0_5, %c0_6] : memref<1x32xf32, #tpu.memory_space<vmem>>, vector<1x32xf32>
    tpu.vector_store %arg3[%c0_5, %c0_6], %4 {strides = array<i32>} : memref<1x32xf32, #tpu.memory_space<vmem>>, vector<1x32xf32>,
    return
  }
}

</mosaic_0001>

<llo_original>
// kernel: tpu_custom_call.1
$region0: #{tpu_custom_call.1}
  #allocation0 [shape = 'u32[]', space=smem, size = 0x4, offset = 0x4, fixed_abs, tag = 'smem constant byte address 0x4 - core index']
  #allocation1 [shape = 'u32[144,128]{1,0:T(1,128)}', space=vmem, size = 0x12000, scoped, tag = 'internal scratch']
  %s0 = inlined_call_operand.hbm [shape: f32[1,32], index: 0, kind: input, shape index: {}]
  %s1 = inlined_call_operand.hbm [shape: f32[32,32], index: 1, kind: input, shape index: {}]
  %s2 = inlined_call_operand.vmem [shape: f32[1,32], index: 2, kind: input, shape index: {}]
  %s3 = inlined_call_operand.hbm [shape: f32[1,32], index: 3, kind: output, shape index: {}]
  %s4 = sld [smem:[#allocation0]]
  $region30: #{tpu_custom_call.1} parent=0
    _
  %s6 = ssub.s32 1, %s4
  %s7 = scalar_select 0, %s6, %s4
  $region1: #{tpu_custom_call.1} parent=0
    #allocation2 [shape = 'u8[512]{0}', space=vmem, size = 0x400, scoped, tag = 'input window, operand 0, single buffered']
    #allocation3 [shape = 's32[1]{0}', space=sflag, size = 0x4, scoped, tag = 'scoped memory for tpu_custom_call.1']
    #allocation4 [shape = 's32[1]{0}', space=sflag, size = 0x4, scoped, tag = 'scoped memory for tpu_custom_call.1']
    #allocation5 [shape = 'u8[16384]{0}', space=vmem, size = 0x4000, scoped, tag = 'input window, operand 1, single buffered']
    #allocation6 [shape = 's32[1]{0}', space=sflag, size = 0x4, scoped, tag = 'scoped memory for tpu_custom_call.1']
    #allocation7 [shape = 'u8[512]{0}', space=vmem, size = 0x400, scoped, tag = 'output window, operand 0, single buffered']
    %8 = vsyncpa [#allocation3], 0
    %9 = vsyncpa [#allocation6], 0
    %10 = vsyncpa [#allocation4], 0
    // Predicated region
    $region2: #{tpu_custom_call.1} parent=1 // pred_check
      _
    $region3: #{tpu_custom_call.1} parent=1 // pred_check_branch
      %12 = sbr.rel (0) target = $region5
    $region4: #{tpu_custom_call.1} parent=1 // pred_region
      %s14 = ssub.s32 16, 16
      %15 = vsyncadd [#allocation3], %s14
      %s17 = sshll.u32 [#allocation2], 4
      %s18 = int_to_ptr.vmem [resolvable:$true] %s17
      %20 = dma.hbm_to_vmem [thread:$0]  %s0, 16, %s18, [#allocation3]
    $region5: #{tpu_custom_call.1} parent=1 // pred_fallthru
      _
    // Predicated region
    $region6: #{tpu_custom_call.1} parent=1 // pred_check
      _
    $region7: #{tpu_custom_call.1} parent=1 // pred_check_branch
      %22 = sbr.rel (0) target = $region9
    $region8: #{tpu_custom_call.1} parent=1 // pred_region
      %s24 = ssub.s32 512, 512
      %25 = vsyncadd [#allocation6], %s24
      %s26 = sshll.u32 [#allocation5], 4
      %s27 = int_to_ptr.vmem [resolvable:$true] %s26
      %32 = dma.hbm_to_vmem [thread:$0]  %s1, 512, %s27, [#allocation6], 128, 128, 8
    $region9: #{tpu_custom_call.1} parent=1 // pred_fallthru
      _
    // Predicated region
    $region10: #{tpu_custom_call.1} parent=1 // pred_check
      _
    $region11: #{tpu_custom_call.1} parent=1 // pred_check_branch
      %34 = sbr.rel (0) target = $region13
    $region12: #{tpu_custom_call.1} parent=1 // pred_region
      _
    $region13: #{tpu_custom_call.1} parent=1 // pred_fallthru
      _
    // Predicated region
    $region14: #{tpu_custom_call.1} parent=1 // pred_check
      _
    $region15: #{tpu_custom_call.1} parent=1 // pred_check_branch
      %36 = sbr.rel (0) target = $region17
    $region16: #{tpu_custom_call.1} parent=1 // pred_region
      %37 = dma.done [#allocation3], 16
    $region17: #{tpu_custom_call.1} parent=1 // pred_fallthru
      _
    // Predicated region
    $region18: #{tpu_custom_call.1} parent=1 // pred_check
      _
    $region19: #{tpu_custom_call.1} parent=1 // pred_check_branch
      %39 = sbr.rel (0) target = $region21
    $region20: #{tpu_custom_call.1} parent=1 // pred_region
      %40 = dma.done [#allocation6], 512
    $region21: #{tpu_custom_call.1} parent=1 // pred_fallthru
      _
    %v41 = vld [vmem:[#allocation2] sm:$0x1]
    %v42 = vld [vmem:[#allocation5] sm:$0xff]
    %v43 = vld [vmem:[#allocation5 + $0x8] sm:$0xff]
    %v44 = vld [vmem:[#allocation5 + $0x10] sm:$0xff]
    %v45 = vld [vmem:[#allocation5 + $0x18] sm:$0xff]
    %v46 = vld [vmem:[%s2] sm:$0x1]
    %vm47 = vcmask 261120
    %v49 = vsel %vm47, %v41, 0
    %v52 = vsel %vm47, %v42, 0
    %v55 = vsel %vm47, %v43, 0
    %v58 = vsel %vm47, %v44, 0
    %v61 = vsel %vm47, %v45, 0
    %63 = vmatprep.subr.mxu0 0.0
    %64 = vmatpush1.xpose.msra.mxu0 0.0
    %65 = vmatprep.subr.mxu0 0.0
    %66 = vmatpush1.xpose.msra.mxu0 0.0
    %67 = vmatprep.subr.mxu0 0.0
    %68 = vmatpush1.xpose.msra.mxu0 0.0
    %69 = vmatprep.subr.mxu0 0.0
    %70 = vmatpush1.xpose.msra.mxu0 0.0
    %71 = vmatprep.subr.mxu0 0.0
    %72 = vmatpush1.xpose.msra.mxu0 0.0
    %73 = vmatprep.subr.mxu0 0.0
    %74 = vmatpush1.xpose.msra.mxu0 0.0
    %75 = vmatprep.subr.mxu0 0.0
    %76 = vmatpush1.xpose.msra.mxu0 0.0
    %77 = vmatprep.subr.mxu0 0.0
    %78 = vmatpush1.xpose.msra.mxu0 0.0
    %79 = vmatprep.subr.mxu0 0.0
    %80 = vmatpush1.xpose.msra.mxu0 0.0
    %81 = vmatprep.subr.mxu0 0.0
    %82 = vmatpush1.xpose.msra.mxu0 0.0
    %83 = vmatprep.subr.mxu0 0.0
    %84 = vmatpush1.xpose.msra.mxu0 0.0
    %85 = vmatprep.subr.mxu0 0.0
    %86 = vmatpush1.xpose.msra.mxu0 0.0
    %87 = vmatprep.subr.mxu0 0.0
    %88 = vmatpush1.xpose.msra.mxu0 %v61
    %89 = vmatprep.subr.mxu0 0.0
    %90 = vmatpush1.xpose.msra.mxu0 %v58
    %91 = vmatprep.subr.mxu0 0.0
    %92 = vmatpush1.xpose.msra.mxu0 %v55
    %93 = vmatprep.subr.mxu0 0.0
    %94 = vmatpush1.xpose.msra.mxu0 %v52
    %95 = vmatprep.subr.mxu0 0.0
    %96 = vmatpush2.xpose.msra.mxu0 0.0
    %97 = vmatprep.subr.mxu0 0.0
    %98 = vmatpush2.xpose.msra.mxu0 0.0
    %99 = vmatprep.subr.mxu0 0.0
    %100 = vmatpush2.xpose.msra.mxu0 0.0
    %101 = vmatprep.subr.mxu0 0.0
    %102 = vmatpush2.xpose.msra.mxu0 0.0
    %103 = vmatprep.subr.mxu0 0.0
    %104 = vmatpush2.xpose.msra.mxu0 0.0
    %105 = vmatprep.subr.mxu0 0.0
    %106 = vmatpush2.xpose.msra.mxu0 0.0
    %107 = vmatprep.subr.mxu0 0.0
    %108 = vmatpush2.xpose.msra.mxu0 0.0
    %109 = vmatprep.subr.mxu0 0.0
    %110 = vmatpush2.xpose.msra.mxu0 0.0
    %111 = vmatprep.subr.mxu0 0.0
    %112 = vmatpush2.xpose.msra.mxu0 0.0
    %113 = vmatprep.subr.mxu0 0.0
    %114 = vmatpush2.xpose.msra.mxu0 0.0
    %115 = vmatprep.subr.mxu0 0.0
    %116 = vmatpush2.xpose.msra.mxu0 0.0
    %117 = vmatprep.subr.mxu0 0.0
    %118 = vmatpush2.xpose.msra.mxu0 0.0
    %119 = vmatprep.subr.mxu0 0.0
    %120 = vmatpush2.xpose.msra.mxu0 0.0
    %121 = vmatprep.subr.mxu0 0.0
    %122 = vmatpush2.xpose.msra.mxu0 0.0
    %123 = vmatprep.subr.mxu0 0.0
    %124 = vmatpush2.xpose.msra.mxu0 0.0
    %125 = vmatprep.subr.mxu0 0.0
    %126 = vmatpush2.xpose.msra.mxu0 0.0
    %127 = vmatprep.mubr.f32.mxu0 0.0
    %128 = vmatmul.mubr.f32.gmra.mxu0 %v49
    %v129 = vpop.f32.mrf.mxu0
    %v130 = vadd.f32 %v46, %v129
    %v131 = vpop.f32.mrf.mxu0
    %132 = vdwg.mxu0
    %vm133 = vcmask 253952
    %134 = vst.msk [vmem:[#allocation7] sm:$0x1] %vm133, %v130
    // Predicated region
    $region22: #{tpu_custom_call.1} parent=1 // pred_check
      _
    $region23: #{tpu_custom_call.1} parent=1 // pred_check_branch
      %136 = sbr.rel (0) target = $region25
    $region24: #{tpu_custom_call.1} parent=1 // pred_region
      %s138 = ssub.s32 16, 16
      %139 = vsyncadd [#allocation4], %s138
      %s141 = sshll.u32 [#allocation7], 4
      %s142 = int_to_ptr.vmem [resolvable:$true] %s141
      %144 = dma.vmem_to_hbm [thread:$0]  %s142, 16, %s3, [#allocation4]
    $region25: #{tpu_custom_call.1} parent=1 // pred_fallthru
      _
    // Predicated region
    $region26: #{tpu_custom_call.1} parent=1 // pred_check
      _
    $region27: #{tpu_custom_call.1} parent=1 // pred_check_branch
      %146 = sbr.rel (0) target = $region29
    $region28: #{tpu_custom_call.1} parent=1 // pred_region
      %147 = dma.done [#allocation4], 16
    $region29: #{tpu_custom_call.1} parent=1 // pred_fallthru
      _
    %148 = vsyncpa [#allocation3], 1
    %149 = vsyncpa [#allocation6], 1
    %150 = vsyncpa [#allocation4], 1

</llo_original>
